<compile_context>
chip_gen: v5e
topology: v5e:2x2
jax: 0.10.0
libtpu: 0.0.40
codegen_flags: <defaults>
</compile_context>

<pallas_src>
import jax
import jax.numpy as jnp
from jax import lax
from jax.experimental import pallas as pl
from jax.experimental.pallas import tpu as pltpu

# ---- LIF neuron parameters (norse defaults), fixed deterministically ----
DT = 0.001
TAU_SYN_INV = 1.0 / 5e-3   # 200.0
TAU_MEM_INV = 1.0 / 1e-2   # 100.0
V_LEAK = 0.0
V_TH = 1.0
V_RESET = 0.0

# Folded constants (fewer VALU ops per element-step):
#   v_decayed = v + dt*tau_mem_inv*((v_leak - v) + i) = A_MEM*v + B_MEM*i + B_MEM*v_leak
#   i_decayed = i - dt*tau_syn_inv*i               = C_SYN*i
A_MEM = 1.0 - DT * TAU_MEM_INV       # 0.9
B_MEM = DT * TAU_MEM_INV             # 0.1
MEM_BIAS = B_MEM * V_LEAK            # 0.0 (dropped when zero)
C_SYN = 1.0 - DT * TAU_SYN_INV       # 0.8


def _round_up(x, m):
    return (x + m - 1) // m * m


def _make_kernel(TT, T_actual, T_pad, unroll):
    """Per-(neuron-tile, time-chunk) kernel.

    Refs:
      x_ref: (TT, SL, 128) input slab
      z_ref: (TT, SL, 128) output spikes
      v_ref, i_ref: (SL, 128) final LIF state; VMEM-resident across the time
                    axis (same block index) -> doubles as the recurrence carry.
    """
    n_tc = T_pad // TT
    needs_time_mask = T_pad != T_actual

    def kernel(x_ref, z_ref, v_ref, i_ref):
        tc = pl.program_id(1)  # time-chunk index (sequential axis)

        # state_fallback: zero state at the first time-chunk of each tile.
        @pl.when(tc == 0)
        def _():
            v_ref[...] = jnp.zeros_like(v_ref)
            i_ref[...] = jnp.zeros_like(i_ref)

        def run_chunk(masked):
            # Read the carried state once per chunk; keep it in f32 registers.
            v0 = v_ref[...].astype(jnp.float32)
            i0 = i_ref[...].astype(jnp.float32)

            def step(s, carry):
                v, i = carry
                x_t = x_ref[s].astype(jnp.float32)        # dense (SL, 128) tile

                v_decayed = A_MEM * v + B_MEM * i
                if MEM_BIAS != 0.0:
                    v_decayed = v_decayed + MEM_BIAS
                i_decayed = C_SYN * i

                # heaviside(v_decayed - v_th): strict > (norse uses torch.gt)
                spk = v_decayed > V_TH
                z_ref[s] = spk.astype(z_ref.dtype)        # dense, unmasked vst

                v_new = jnp.where(spk, V_RESET, v_decayed)
                i_new = i_decayed + x_t

                if masked:
                    # Padded (beyond-T) timesteps must not advance the state.
                    valid = (tc * TT + s) < T_actual
                    v_new = jnp.where(valid, v_new, v)
                    i_new = jnp.where(valid, i_new, i)
                return (v_new, i_new)

            vT, iT = lax.fori_loop(0, TT, step, (v0, i0), unroll=unroll)

            # Write the carried state once per chunk (last chunk's value is
            # what lands in HBM).
            v_ref[...] = vT.astype(v_ref.dtype)
            i_ref[...] = iT.astype(i_ref.dtype)

        if not needs_time_mask:
            run_chunk(False)
        elif n_tc == 1:
            run_chunk(True)
        else:
            # Masking only on the tail chunk; fast unmasked body elsewhere.
            @pl.when(tc == n_tc - 1)
            def _():
                run_chunk(True)

            @pl.when(tc < n_tc - 1)
            def _():
                run_chunk(False)

    return kernel


def snn_forward(x, *, tt_max=128, tn_max=4096, spike_dtype=None):
    """x: (T, *rest) float.  Returns (spikes (T, *rest), (v_final, i_final))."""
    T = x.shape[0]
    rest = x.shape[1:]
    N = 1
    for d in rest:
        N *= int(d)
    in_dtype = x.dtype
    spike_dtype = in_dtype if spike_dtype is None else jnp.dtype(spike_dtype)
    state_dtype = jnp.float32  # recurrence carry kept in f32 for precision

    # ---- neuron axis: (sublane, lane)-dense layout ----
    # TN is a multiple of 1024 (= 8 sublanes x 128 lanes) so each per-timestep
    # tile is a full (8,128)-aligned slab; pad N up to a multiple of TN.
    assert tn_max % 1024 == 0 and tn_max >= 1024
    n_pad_min = _round_up(N, 1024)
    TN = min(tn_max, n_pad_min)
    # v7x megacore: prefer >= 2 neuron tiles when there is enough work.
    if n_pad_min >= 2 * 1024:
        TN = min(TN, max(1024, (n_pad_min // 2) // 1024 * 1024))
    N_pad = _round_up(N, TN)
    SL = TN // 128  # sublane rows per neuron tile (multiple of 8)

    # ---- time axis: chunk size (multiple of 8) ----
    TT = min(_round_up(T, 8), _round_up(tt_max, 8))
    T_pad = _round_up(T, TT)

    x2 = x.reshape(T, N)
    if T_pad != T or N_pad != N:
        # Zero-padded neurons never spike (v stays below threshold); padded
        # timesteps are masked inside the kernel so they don't alter state.
        x2 = jnp.pad(x2, ((0, T_pad - T), (0, N_pad - N)))
    x3 = x2.reshape(T_pad, N_pad // 128, 128)

    grid = (N_pad // TN, T_pad // TT)

    # Explicit VMEM budget from the actual double-buffered need, with
    # headroom; capped to stay inside a v7x core's 64 MiB physical VMEM.
    itemsize_in = jnp.dtype(in_dtype).itemsize
    itemsize_sp = jnp.dtype(spike_dtype).itemsize
    vmem_needed = (2 * TT * TN * itemsize_in          # x slab, double-buffered
                   + 2 * TT * TN * itemsize_sp        # z slab, double-buffered
                   + 2 * 2 * TN * 4)                  # v/i state blocks
    vmem_limit = int(min(max(2 * vmem_needed, 16 * 2**20), 48 * 2**20))

    kernel = _make_kernel(TT, T, T_pad, unroll=8)

    spikes3, v3, i3 = pl.pallas_call(
        kernel,
        out_shape=(
            jax.ShapeDtypeStruct((T_pad, N_pad // 128, 128), spike_dtype),
            jax.ShapeDtypeStruct((N_pad // 128, 128), state_dtype),
            jax.ShapeDtypeStruct((N_pad // 128, 128), state_dtype),
        ),
        grid_spec=pltpu.PrefetchScalarGridSpec(
            num_scalar_prefetch=0,
            grid=grid,
            in_specs=[
                pl.BlockSpec((TT, SL, 128), lambda n, t: (t, n, 0)),
            ],
            out_specs=[
                pl.BlockSpec((TT, SL, 128), lambda n, t: (t, n, 0)),
                pl.BlockSpec((SL, 128), lambda n, t: (n, 0)),
                pl.BlockSpec((SL, 128), lambda n, t: (n, 0)),
            ],
        ),
        compiler_params=pltpu.CompilerParams(
            # neuron tiles are independent (both TCs on v7x); the time axis is
            # a sequential recurrence.
            dimension_semantics=("parallel", "arbitrary"),
            vmem_limit_bytes=vmem_limit,
        ),
    )(x3)

    spikes = spikes3.reshape(T_pad, N_pad)[:T, :N].reshape((T,) + rest)
    v_final = v3.reshape(N_pad)[:N].reshape(rest).astype(in_dtype)
    i_final = i3.reshape(N_pad)[:N].reshape(rest).astype(in_dtype)
    return spikes, (v_final, i_final)


def snn_forward_ref(x):
    """Pure-JAX reference mirroring the PyTorch time loop (norse op order)."""

    def step(carry, xt):
        v, i = carry
        dv = (DT * TAU_MEM_INV) * ((V_LEAK - v) + i)
        v_decayed = v + dv
        di = (-DT * TAU_SYN_INV) * i
        i_decayed = i + di
        z = ((v_decayed - V_TH) > 0.0).astype(x.dtype)
        v_new = (1.0 - z) * v_decayed + z * V_RESET
        i_new = i_decayed + xt
        return (v_new, i_new), z

    v0 = jnp.zeros(x.shape[1:], x.dtype)
    i0 = jnp.zeros(x.shape[1:], x.dtype)
    (vf, inf_), zs = lax.scan(step, (v0, i0), x)
    return zs, (vf, inf_)


def _check(x, **kw):
    spikes, (v_f, i_f) = snn_forward(x, **kw)
    jax.block_until_ready((spikes, v_f, i_f))
    ref_spikes, (ref_v, ref_i) = snn_forward_ref(x)
    assert spikes.shape == x.shape
    assert v_f.shape == x.shape[1:] and i_f.shape == x.shape[1:]
    assert jnp.allclose(spikes.astype(jnp.float32),
                        ref_spikes.astype(jnp.float32), atol=1e-5)
    assert jnp.allclose(v_f.astype(jnp.float32), ref_v, atol=1e-5)
    assert jnp.allclose(i_f.astype(jnp.float32), ref_i, atol=1e-5)


if __name__ == "__main__":
    key = jax.random.PRNGKey(0)

    # Primary case: small (T, B, H), scaled so some neurons actually spike.
    T, B, H = 8, 2, 32
    x = 3.0 * jax.random.uniform(key, (T, B, H), dtype=jnp.float32)
    _check(x)

    # Exercise multi-chunk time axis + tail-time masking + neuron padding.
    k2 = jax.random.PRNGKey(1)
    x2 = 3.0 * jax.random.uniform(k2, (20, 3, 40), dtype=jnp.float32)
    _check(x2, tt_max=8)

    # Narrow spike-output dtype path (lossless: spikes are exactly 0/1).
    _check(x, spike_dtype=jnp.bfloat16)

    # TODO(synk): record_states=True path (_merge_states stacking of per-step
    # states) is not implemented; only the default record_states=False forward.

    print("KERNEL_OK")
</pallas_src>

<mosaic_0001>
module attributes {stable_mosaic.version = 11 : i64} {
  func.func @kernel(%arg0: i32, %arg1: i32, %arg2: memref<8x8x128xf32, #tpu.memory_space<vmem>>, %arg3: memref<8x8x128xf32, #tpu.memory_space<vmem>>, %arg4: memref<8x128xf32, #tpu.memory_space<vmem>>, %arg5: memref<8x128xf32, #tpu.memory_space<vmem>>) attributes {dimension_semantics = [#tpu.dimension_semantics<parallel>, #tpu.dimension_semantics<arbitrary>], iteration_bounds = array<i64: 1, 1>, scalar_prefetch = 0 : i64, scratch_operands = 0 : i64, tpu.core_type = #tpu.core_type<tc>, window_params = [{transform_indices = @transform_0, window_bounds = array<i64: 8, 8, 128>}, {transform_indices = @transform_1, window_bounds = array<i64: 8, 8, 128>}, {transform_indices = @transform_2, window_bounds = array<i64: 8, 128>}, {transform_indices = @transform_3, window_bounds = array<i64: 8, 128>}]} {
    %c0_i32 = arith.constant 0 : i32
    %0 = arith.cmpi eq, %arg1, %c0_i32 : i32
    %1 = arith.extui %0 : i1 to i32
    %c0_i32_0 = arith.constant 0 : i32
    %2 = arith.cmpi ne, %1, %c0_i32_0 : i32
    scf.if %2 {
      %cst_80 = arith.constant 0.000000e+00 : f32
      %175 = vector.broadcast %cst_80 : f32 to vector<8x128xf32>
      %c0_81 = arith.constant 0 : index
      %c0_82 = arith.constant 0 : index
      %176 = vector.load %arg4[%c0_81, %c0_82] : memref<8x128xf32, #tpu.memory_space<vmem>>, vector<8x128xf32>
      tpu.vector_store %arg4[%c0_81, %c0_82], %175 {strides = array<i32>} : memref<8x128xf32, #tpu.memory_space<vmem>>, vector<8x128xf32>,
      %cst_83 = arith.constant 0.000000e+00 : f32
      %177 = vector.broadcast %cst_83 : f32 to vector<8x128xf32>
      %c0_84 = arith.constant 0 : index
      %c0_85 = arith.constant 0 : index
      %178 = vector.load %arg5[%c0_84, %c0_85] : memref<8x128xf32, #tpu.memory_space<vmem>>, vector<8x128xf32>
      tpu.vector_store %arg5[%c0_84, %c0_85], %177 {strides = array<i32>} : memref<8x128xf32, #tpu.memory_space<vmem>>, vector<8x128xf32>,
    } else {
    }
    %c0 = arith.constant 0 : index
    %c0_1 = arith.constant 0 : index
    %3 = vector.load %arg4[%c0, %c0_1] : memref<8x128xf32, #tpu.memory_space<vmem>>, vector<8x128xf32>
    %c0_2 = arith.constant 0 : index
    %c0_3 = arith.constant 0 : index
    %4 = vector.load %arg5[%c0_2, %c0_3] : memref<8x128xf32, #tpu.memory_space<vmem>>, vector<8x128xf32>
    %c0_i32_4 = arith.constant 0 : i32
    %5 = arith.index_cast %c0_i32_4 : i32 to index
    %c0_5 = arith.constant 0 : index
    %c0_6 = arith.constant 0 : index
    %6 = vector.load %arg2[%5, %c0_5, %c0_6] : memref<8x8x128xf32, #tpu.memory_space<vmem>>, vector<1x8x128xf32>
    %7 = vector.shape_cast %6 : vector<1x8x128xf32> to vector<8x128xf32>
    %cst = arith.constant 0.899999976 : f32
    %8 = vector.broadcast %cst : f32 to vector<8x128xf32>
    %9 = arith.mulf %8, %3 : vector<8x128xf32>
    %cst_7 = arith.constant 1.000000e-01 : f32
    %10 = vector.broadcast %cst_7 : f32 to vector<8x128xf32>
    %11 = arith.mulf %10, %4 : vector<8x128xf32>
    %12 = arith.addf %9, %11 : vector<8x128xf32>
    %cst_8 = arith.constant 8.000000e-01 : f32
    %13 = vector.broadcast %cst_8 : f32 to vector<8x128xf32>
    %14 = arith.mulf %13, %4 : vector<8x128xf32>
    %cst_9 = arith.constant 1.000000e+00 : f32
    %15 = vector.broadcast %cst_9 : f32 to vector<8x128xf32>
    %16 = arith.cmpf ogt, %12, %15 : vector<8x128xf32>
    %17 = arith.extui %16 : vector<8x128xi1> to vector<8x128xi32>
    %18 = arith.sitofp %17 : vector<8x128xi32> to vector<8x128xf32>
    %19 = arith.index_cast %c0_i32_4 : i32 to index
    %c0_10 = arith.constant 0 : index
    %c0_11 = arith.constant 0 : index
    %20 = vector.load %arg3[%19, %c0_10, %c0_11] : memref<8x8x128xf32, #tpu.memory_space<vmem>>, vector<1x8x128xf32>
    %21 = vector.shape_cast %20 : vector<1x8x128xf32> to vector<8x128xf32>
    %22 = vector.shape_cast %18 : vector<8x128xf32> to vector<1x8x128xf32>
    tpu.vector_store %arg3[%19, %c0_10, %c0_11], %22 {strides = array<i32>} : memref<8x8x128xf32, #tpu.memory_space<vmem>>, vector<1x8x128xf32>,
    %cst_12 = arith.constant 0.000000e+00 : f32
    %23 = vector.broadcast %cst_12 : f32 to vector<8x128xf32>
    %24 = arith.select %16, %23, %12 : vector<8x128xi1>, vector<8x128xf32>
    %25 = arith.addf %14, %7 : vector<8x128xf32>
    %c1_i32 = arith.constant 1 : i32
    %26 = arith.index_cast %c1_i32 : i32 to index
    %c0_13 = arith.constant 0 : index
    %c0_14 = arith.constant 0 : index
    %27 = vector.load %arg2[%26, %c0_13, %c0_14] : memref<8x8x128xf32, #tpu.memory_space<vmem>>, vector<1x8x128xf32>
    %28 = vector.shape_cast %27 : vector<1x8x128xf32> to vector<8x128xf32>
    %cst_15 = arith.constant 0.899999976 : f32
    %29 = vector.broadcast %cst_15 : f32 to vector<8x128xf32>
    %30 = arith.mulf %29, %24 : vector<8x128xf32>
    %cst_16 = arith.constant 1.000000e-01 : f32
    %31 = vector.broadcast %cst_16 : f32 to vector<8x128xf32>
    %32 = arith.mulf %31, %25 : vector<8x128xf32>
    %33 = arith.addf %30, %32 : vector<8x128xf32>
    %cst_17 = arith.constant 8.000000e-01 : f32
    %34 = vector.broadcast %cst_17 : f32 to vector<8x128xf32>
    %35 = arith.mulf %34, %25 : vector<8x128xf32>
    %cst_18 = arith.constant 1.000000e+00 : f32
    %36 = vector.broadcast %cst_18 : f32 to vector<8x128xf32>
    %37 = arith.cmpf ogt, %33, %36 : vector<8x128xf32>
    %38 = arith.extui %37 : vector<8x128xi1> to vector<8x128xi32>
    %39 = arith.sitofp %38 : vector<8x128xi32> to vector<8x128xf32>
    %40 = arith.index_cast %c1_i32 : i32 to index
    %c0_19 = arith.constant 0 : index
    %c0_20 = arith.constant 0 : index
    %41 = vector.load %arg3[%40, %c0_19, %c0_20] : memref<8x8x128xf32, #tpu.memory_space<vmem>>, vector<1x8x128xf32>
    %42 = vector.shape_cast %41 : vector<1x8x128xf32> to vector<8x128xf32>
    %43 = vector.shape_cast %39 : vector<8x128xf32> to vector<1x8x128xf32>
    tpu.vector_store %arg3[%40, %c0_19, %c0_20], %43 {strides = array<i32>} : memref<8x8x128xf32, #tpu.memory_space<vmem>>, vector<1x8x128xf32>,
    %cst_21 = arith.constant 0.000000e+00 : f32
    %44 = vector.broadcast %cst_21 : f32 to vector<8x128xf32>
    %45 = arith.select %37, %44, %33 : vector<8x128xi1>, vector<8x128xf32>
    %46 = arith.addf %35, %28 : vector<8x128xf32>
    %c2_i32 = arith.constant 2 : i32
    %47 = arith.index_cast %c2_i32 : i32 to index
    %c0_22 = arith.constant 0 : index
    %c0_23 = arith.constant 0 : index
    %48 = vector.load %arg2[%47, %c0_22, %c0_23] : memref<8x8x128xf32, #tpu.memory_space<vmem>>, vector<1x8x128xf32>
    %49 = vector.shape_cast %48 : vector<1x8x128xf32> to vector<8x128xf32>
    %cst_24 = arith.constant 0.899999976 : f32
    %50 = vector.broadcast %cst_24 : f32 to vector<8x128xf32>
    %51 = arith.mulf %50, %45 : vector<8x128xf32>
    %cst_25 = arith.constant 1.000000e-01 : f32
    %52 = vector.broadcast %cst_25 : f32 to vector<8x128xf32>
    %53 = arith.mulf %52, %46 : vector<8x128xf32>
    %54 = arith.addf %51, %53 : vector<8x128xf32>
    %cst_26 = arith.constant 8.000000e-01 : f32
    %55 = vector.broadcast %cst_26 : f32 to vector<8x128xf32>
    %56 = arith.mulf %55, %46 : vector<8x128xf32>
    %cst_27 = arith.constant 1.000000e+00 : f32
    %57 = vector.broadcast %cst_27 : f32 to vector<8x128xf32>
    %58 = arith.cmpf ogt, %54, %57 : vector<8x128xf32>
    %59 = arith.extui %58 : vector<8x128xi1> to vector<8x128xi32>
    %60 = arith.sitofp %59 : vector<8x128xi32> to vector<8x128xf32>
    %61 = arith.index_cast %c2_i32 : i32 to index
    %c0_28 = arith.constant 0 : index
    %c0_29 = arith.constant 0 : index
    %62 = vector.load %arg3[%61, %c0_28, %c0_29] : memref<8x8x128xf32, #tpu.memory_space<vmem>>, vector<1x8x128xf32>
    %63 = vector.shape_cast %62 : vector<1x8x128xf32> to vector<8x128xf32>
    %64 = vector.shape_cast %60 : vector<8x128xf32> to vector<1x8x128xf32>
    tpu.vector_store %arg3[%61, %c0_28, %c0_29], %64 {strides = array<i32>} : memref<8x8x128xf32, #tpu.memory_space<vmem>>, vector<1x8x128xf32>,
    %cst_30 = arith.constant 0.000000e+00 : f32
    %65 = vector.broadcast %cst_30 : f32 to vector<8x128xf32>
    %66 = arith.select %58, %65, %54 : vector<8x128xi1>, vector<8x128xf32>
    %67 = arith.addf %56, %49 : vector<8x128xf32>
    %c3_i32 = arith.constant 3 : i32
    %68 = arith.index_cast %c3_i32 : i32 to index
    %c0_31 = arith.constant 0 : index
    %c0_32 = arith.constant 0 : index
    %69 = vector.load %arg2[%68, %c0_31, %c0_32] : memref<8x8x128xf32, #tpu.memory_space<vmem>>, vector<1x8x128xf32>
    %70 = vector.shape_cast %69 : vector<1x8x128xf32> to vector<8x128xf32>
    %cst_33 = arith.constant 0.899999976 : f32
    %71 = vector.broadcast %cst_33 : f32 to vector<8x128xf32>
    %72 = arith.mulf %71, %66 : vector<8x128xf32>
    %cst_34 = arith.constant 1.000000e-01 : f32
    %73 = vector.broadcast %cst_34 : f32 to vector<8x128xf32>
    %74 = arith.mulf %73, %67 : vector<8x128xf32>
    %75 = arith.addf %72, %74 : vector<8x128xf32>
    %cst_35 = arith.constant 8.000000e-01 : f32
    %76 = vector.broadcast %cst_35 : f32 to vector<8x128xf32>
    %77 = arith.mulf %76, %67 : vector<8x128xf32>
    %cst_36 = arith.constant 1.000000e+00 : f32
    %78 = vector.broadcast %cst_36 : f32 to vector<8x128xf32>
    %79 = arith.cmpf ogt, %75, %78 : vector<8x128xf32>
    %80 = arith.extui %79 : vector<8x128xi1> to vector<8x128xi32>
    %81 = arith.sitofp %80 : vector<8x128xi32> to vector<8x128xf32>
    %82 = arith.index_cast %c3_i32 : i32 to index
    %c0_37 = arith.constant 0 : index
    %c0_38 = arith.constant 0 : index
    %83 = vector.load %arg3[%82, %c0_37, %c0_38] : memref<8x8x128xf32, #tpu.memory_space<vmem>>, vector<1x8x128xf32>
    %84 = vector.shape_cast %83 : vector<1x8x128xf32> to vector<8x128xf32>
    %85 = vector.shape_cast %81 : vector<8x128xf32> to vector<1x8x128xf32>
    tpu.vector_store %arg3[%82, %c0_37, %c0_38], %85 {strides = array<i32>} : memref<8x8x128xf32, #tpu.memory_space<vmem>>, vector<1x8x128xf32>,
    %cst_39 = arith.constant 0.000000e+00 : f32
    %86 = vector.broadcast %cst_39 : f32 to vector<8x128xf32>
    %87 = arith.select %79, %86, %75 : vector<8x128xi1>, vector<8x128xf32>
    %88 = arith.addf %77, %70 : vector<8x128xf32>
    %c4_i32 = arith.constant 4 : i32
    %89 = arith.index_cast %c4_i32 : i32 to index
    %c0_40 = arith.constant 0 : index
    %c0_41 = arith.constant 0 : index
    %90 = vector.load %arg2[%89, %c0_40, %c0_41] : memref<8x8x128xf32, #tpu.memory_space<vmem>>, vector<1x8x128xf32>
    %91 = vector.shape_cast %90 : vector<1x8x128xf32> to vector<8x128xf32>
    %cst_42 = arith.constant 0.899999976 : f32
    %92 = vector.broadcast %cst_42 : f32 to vector<8x128xf32>
    %93 = arith.mulf %92, %87 : vector<8x128xf32>
    %cst_43 = arith.constant 1.000000e-01 : f32
    %94 = vector.broadcast %cst_43 : f32 to vector<8x128xf32>
    %95 = arith.mulf %94, %88 : vector<8x128xf32>
    %96 = arith.addf %93, %95 : vector<8x128xf32>
    %cst_44 = arith.constant 8.000000e-01 : f32
    %97 = vector.broadcast %cst_44 : f32 to vector<8x128xf32>
    %98 = arith.mulf %97, %88 : vector<8x128xf32>
    %cst_45 = arith.constant 1.000000e+00 : f32
    %99 = vector.broadcast %cst_45 : f32 to vector<8x128xf32>
    %100 = arith.cmpf ogt, %96, %99 : vector<8x128xf32>
    %101 = arith.extui %100 : vector<8x128xi1> to vector<8x128xi32>
    %102 = arith.sitofp %101 : vector<8x128xi32> to vector<8x128xf32>
    %103 = arith.index_cast %c4_i32 : i32 to index
    %c0_46 = arith.constant 0 : index
    %c0_47 = arith.constant 0 : index
    %104 = vector.load %arg3[%103, %c0_46, %c0_47] : memref<8x8x128xf32, #tpu.memory_space<vmem>>, vector<1x8x128xf32>
    %105 = vector.shape_cast %104 : vector<1x8x128xf32> to vector<8x128xf32>
    %106 = vector.shape_cast %102 : vector<8x128xf32> to vector<1x8x128xf32>
    tpu.vector_store %arg3[%103, %c0_46, %c0_47], %106 {strides = array<i32>} : memref<8x8x128xf32, #tpu.memory_space<vmem>>, vector<1x8x128xf32>,
    %cst_48 = arith.constant 0.000000e+00 : f32
    %107 = vector.broadcast %cst_48 : f32 to vector<8x128xf32>
    %108 = arith.select %100, %107, %96 : vector<8x128xi1>, vector<8x128xf32>
    %109 = arith.addf %98, %91 : vector<8x128xf32>
    %c5_i32 = arith.constant 5 : i32
    %110 = arith.index_cast %c5_i32 : i32 to index
    %c0_49 = arith.constant 0 : index
    %c0_50 = arith.constant 0 : index
    %111 = vector.load %arg2[%110, %c0_49, %c0_50] : memref<8x8x128xf32, #tpu.memory_space<vmem>>, vector<1x8x128xf32>
    %112 = vector.shape_cast %111 : vector<1x8x128xf32> to vector<8x128xf32>
    %cst_51 = arith.constant 0.899999976 : f32
    %113 = vector.broadcast %cst_51 : f32 to vector<8x128xf32>
    %114 = arith.mulf %113, %108 : vector<8x128xf32>
    %cst_52 = arith.constant 1.000000e-01 : f32
    %115 = vector.broadcast %cst_52 : f32 to vector<8x128xf32>
    %116 = arith.mulf %115, %109 : vector<8x128xf32>
    %117 = arith.addf %114, %116 : vector<8x128xf32>
    %cst_53 = arith.constant 8.000000e-01 : f32
    %118 = vector.broadcast %cst_53 : f32 to vector<8x128xf32>
    %119 = arith.mulf %118, %109 : vector<8x128xf32>
    %cst_54 = arith.constant 1.000000e+00 : f32
    %120 = vector.broadcast %cst_54 : f32 to vector<8x128xf32>
    %121 = arith.cmpf ogt, %117, %120 : vector<8x128xf32>
    %122 = arith.extui %121 : vector<8x128xi1> to vector<8x128xi32>
    %123 = arith.sitofp %122 : vector<8x128xi32> to vector<8x128xf32>
    %124 = arith.index_cast %c5_i32 : i32 to index
    %c0_55 = arith.constant 0 : index
    %c0_56 = arith.constant 0 : index
    %125 = vector.load %arg3[%124, %c0_55, %c0_56] : memref<8x8x128xf32, #tpu.memory_space<vmem>>, vector<1x8x128xf32>
    %126 = vector.shape_cast %125 : vector<1x8x128xf32> to vector<8x128xf32>
    %127 = vector.shape_cast %123 : vector<8x128xf32> to vector<1x8x128xf32>
    tpu.vector_store %arg3[%124, %c0_55, %c0_56], %127 {strides = array<i32>} : memref<8x8x128xf32, #tpu.memory_space<vmem>>, vector<1x8x128xf32>,
    %cst_57 = arith.constant 0.000000e+00 : f32
    %128 = vector.broadcast %cst_57 : f32 to vector<8x128xf32>
    %129 = arith.select %121, %128, %117 : vector<8x128xi1>, vector<8x128xf32>
    %130 = arith.addf %119, %112 : vector<8x128xf32>
    %c6_i32 = arith.constant 6 : i32
    %131 = arith.index_cast %c6_i32 : i32 to index
    %c0_58 = arith.constant 0 : index
    %c0_59 = arith.constant 0 : index
    %132 = vector.load %arg2[%131, %c0_58, %c0_59] : memref<8x8x128xf32, #tpu.memory_space<vmem>>, vector<1x8x128xf32>
    %133 = vector.shape_cast %132 : vector<1x8x128xf32> to vector<8x128xf32>
    %cst_60 = arith.constant 0.899999976 : f32
    %134 = vector.broadcast %cst_60 : f32 to vector<8x128xf32>
    %135 = arith.mulf %134, %129 : vector<8x128xf32>
    %cst_61 = arith.constant 1.000000e-01 : f32
    %136 = vector.broadcast %cst_61 : f32 to vector<8x128xf32>
    %137 = arith.mulf %136, %130 : vector<8x128xf32>
    %138 = arith.addf %135, %137 : vector<8x128xf32>
    %cst_62 = arith.constant 8.000000e-01 : f32
    %139 = vector.broadcast %cst_62 : f32 to vector<8x128xf32>
    %140 = arith.mulf %139, %130 : vector<8x128xf32>
    %cst_63 = arith.constant 1.000000e+00 : f32
    %141 = vector.broadcast %cst_63 : f32 to vector<8x128xf32>
    %142 = arith.cmpf ogt, %138, %141 : vector<8x128xf32>
    %143 = arith.extui %142 : vector<8x128xi1> to vector<8x128xi32>
    %144 = arith.sitofp %143 : vector<8x128xi32> to vector<8x128xf32>
    %145 = arith.index_cast %c6_i32 : i32 to index
    %c0_64 = arith.constant 0 : index
    %c0_65 = arith.constant 0 : index
    %146 = vector.load %arg3[%145, %c0_64, %c0_65] : memref<8x8x128xf32, #tpu.memory_space<vmem>>, vector<1x8x128xf32>
    %147 = vector.shape_cast %146 : vector<1x8x128xf32> to vector<8x128xf32>
    %148 = vector.shape_cast %144 : vector<8x128xf32> to vector<1x8x128xf32>
    tpu.vector_store %arg3[%145, %c0_64, %c0_65], %148 {strides = array<i32>} : memref<8x8x128xf32, #tpu.memory_space<vmem>>, vector<1x8x128xf32>,
    %cst_66 = arith.constant 0.000000e+00 : f32
    %149 = vector.broadcast %cst_66 : f32 to vector<8x128xf32>
    %150 = arith.select %142, %149, %138 : vector<8x128xi1>, vector<8x128xf32>
    %151 = arith.addf %140, %133 : vector<8x128xf32>
    %c7_i32 = arith.constant 7 : i32
    %152 = arith.index_cast %c7_i32 : i32 to index
    %c0_67 = arith.constant 0 : index
    %c0_68 = arith.constant 0 : index
    %153 = vector.load %arg2[%152, %c0_67, %c0_68] : memref<8x8x128xf32, #tpu.memory_space<vmem>>, vector<1x8x128xf32>
    %154 = vector.shape_cast %153 : vector<1x8x128xf32> to vector<8x128xf32>
    %cst_69 = arith.constant 0.899999976 : f32
    %155 = vector.broadcast %cst_69 : f32 to vector<8x128xf32>
    %156 = arith.mulf %155, %150 : vector<8x128xf32>
    %cst_70 = arith.constant 1.000000e-01 : f32
    %157 = vector.broadcast %cst_70 : f32 to vector<8x128xf32>
    %158 = arith.mulf %157, %151 : vector<8x128xf32>
    %159 = arith.addf %156, %158 : vector<8x128xf32>
    %cst_71 = arith.constant 8.000000e-01 : f32
    %160 = vector.broadcast %cst_71 : f32 to vector<8x128xf32>
    %161 = arith.mulf %160, %151 : vector<8x128xf32>
    %cst_72 = arith.constant 1.000000e+00 : f32
    %162 = vector.broadcast %cst_72 : f32 to vector<8x128xf32>
    %163 = arith.cmpf ogt, %159, %162 : vector<8x128xf32>
    %164 = arith.extui %163 : vector<8x128xi1> to vector<8x128xi32>
    %165 = arith.sitofp %164 : vector<8x128xi32> to vector<8x128xf32>
    %166 = arith.index_cast %c7_i32 : i32 to index
    %c0_73 = arith.constant 0 : index
    %c0_74 = arith.constant 0 : index
    %167 = vector.load %arg3[%166, %c0_73, %c0_74] : memref<8x8x128xf32, #tpu.memory_space<vmem>>, vector<1x8x128xf32>
    %168 = vector.shape_cast %167 : vector<1x8x128xf32> to vector<8x128xf32>
    %169 = vector.shape_cast %165 : vector<8x128xf32> to vector<1x8x128xf32>
    tpu.vector_store %arg3[%166, %c0_73, %c0_74], %169 {strides = array<i32>} : memref<8x8x128xf32, #tpu.memory_space<vmem>>, vector<1x8x128xf32>,
    %cst_75 = arith.constant 0.000000e+00 : f32
    %170 = vector.broadcast %cst_75 : f32 to vector<8x128xf32>
    %171 = arith.select %163, %170, %159 : vector<8x128xi1>, vector<8x128xf32>
    %172 = arith.addf %161, %154 : vector<8x128xf32>
    %c8_i32 = arith.constant 8 : i32
    %c0_76 = arith.constant 0 : index
    %c0_77 = arith.constant 0 : index
    %173 = vector.load %arg4[%c0_76, %c0_77] : memref<8x128xf32, #tpu.memory_space<vmem>>, vector<8x128xf32>
    tpu.vector_store %arg4[%c0_76, %c0_77], %171 {strides = array<i32>} : memref<8x128xf32, #tpu.memory_space<vmem>>, vector<8x128xf32>,
    %c0_78 = arith.constant 0 : index
    %c0_79 = arith.constant 0 : index
    %174 = vector.load %arg5[%c0_78, %c0_79] : memref<8x128xf32, #tpu.memory_space<vmem>>, vector<8x128xf32>
    tpu.vector_store %arg5[%c0_78, %c0_79], %172 {strides = array<i32>} : memref<8x128xf32, #tpu.memory_space<vmem>>, vector<8x128xf32>,
    return
  }
  func.func @transform_0(%arg0: i32, %arg1: i32) -> (i32, i32, i32) {
    %c0_i32 = arith.constant 0 : i32
    %c0_i32_0 = arith.constant 0 : i32
    return %arg1, %arg0, %c0_i32 : i32, i32, i32
  }
  func.func @transform_1(%arg0: i32, %arg1: i32) -> (i32, i32, i32) {
    %c0_i32 = arith.constant 0 : i32
    %c0_i32_0 = arith.constant 0 : i32
    return %arg1, %arg0, %c0_i32 : i32, i32, i32
  }
  func.func @transform_2(%arg0: i32, %arg1: i32) -> (i32, i32) {
    %c0_i32 = arith.constant 0 : i32
    %c0_i32_0 = arith.constant 0 : i32
    return %arg0, %c0_i32 : i32, i32
  }
  func.func @transform_3(%arg0: i32, %arg1: i32) -> (i32, i32) {
    %c0_i32 = arith.constant 0 : i32
    %c0_i32_0 = arith.constant 0 : i32
    return %arg0, %c0_i32 : i32, i32
  }
}

</mosaic_0001>

<llo_original>
// kernel: tpu_custom_call.1
$region0: #{tpu_custom_call.1}
  #allocation0 [shape = 'u32[]', space=smem, size = 0x4, offset = 0x4, fixed_abs, tag = 'smem constant byte address 0x4 - core index']
  #allocation1 [shape = 'u32[72,128]{1,0:T(1,128)}', space=vmem, size = 0x9000, scoped, tag = 'internal scratch']
  %s0 = inlined_call_operand.hbm [shape: f32[8,8,128], index: 0, kind: input, shape index: {}]
  %s1 = inlined_call_operand.hbm [shape: f32[8,8,128], index: 1, kind: output, shape index: {0}]
  %s2 = inlined_call_operand.hbm [shape: f32[8,128], index: 2, kind: output, shape index: {1}]
  %s3 = inlined_call_operand.hbm [shape: f32[8,128], index: 3, kind: output, shape index: {2}]
  %4 = xla_tuple %s1, %s2, %s3
  %s5 = sld [smem:[#allocation0]]
  $region38: #{tpu_custom_call.1} parent=0
    _
  %s7 = ssub.s32 1, %s5
  %s8 = scalar_select 0, %s7, %s5
  $region1: #{tpu_custom_call.1} parent=0
    #allocation2 [shape = 'u8[32768]{0}', space=vmem, size = 0x8000, scoped, tag = 'input window, operand 0, single buffered']
    #allocation3 [shape = 's32[1]{0}', space=sflag, size = 0x4, scoped, tag = 'scoped memory for tpu_custom_call.1']
    #allocation4 [shape = 's32[1]{0}', space=sflag, size = 0x4, scoped, tag = 'scoped memory for tpu_custom_call.1']
    #allocation5 [shape = 'u8[32768]{0}', space=vmem, size = 0x8000, scoped, tag = 'output window, operand 0, single buffered']
    #allocation6 [shape = 'u8[4096]{0}', space=vmem, size = 0x1000, scoped, tag = 'output window, operand 1, single buffered']
    #allocation7 [shape = 's32[1]{0}', space=sflag, size = 0x4, scoped, tag = 'scoped memory for tpu_custom_call.1']
    #allocation8 [shape = 'u8[4096]{0}', space=vmem, size = 0x1000, scoped, tag = 'output window, operand 2, single buffered']
    %9 = vsyncpa [#allocation3], 0
    %10 = vsyncpa [#allocation4], 0
    %11 = vsyncpa [#allocation7], 0
    // Predicated region
    $region2: #{tpu_custom_call.1} parent=1 // pred_check
      _
    $region3: #{tpu_custom_call.1} parent=1 // pred_check_branch
      %13 = sbr.rel (0) target = $region5
    $region4: #{tpu_custom_call.1} parent=1 // pred_region
      %15 = vsyncadd [#allocation3], 0
      %s16 = sshll.u32 %s0, 4
      %s17 = int_to_ptr.hbm [resolvable:$true] %s16
      %s18 = sshll.u32 [#allocation2], 4
      %s19 = int_to_ptr.vmem [resolvable:$true] %s18
      %24 = dma.hbm_to_vmem [thread:$0]  %s17, 1024, %s19, [#allocation3], 128, 128, 8
    $region5: #{tpu_custom_call.1} parent=1 // pred_fallthru
      _
    // Predicated region
    $region6: #{tpu_custom_call.1} parent=1 // pred_check
      _
    $region7: #{tpu_custom_call.1} parent=1 // pred_check_branch
      %26 = sbr.rel (0) target = $region9
    $region8: #{tpu_custom_call.1} parent=1 // pred_region
      %28 = dma.done [#allocation3], 1024
    $region9: #{tpu_custom_call.1} parent=1 // pred_fallthru
      _
    %p29 = scmp.eq.s32.totalorder 0, 0
    // Predicated region
    $region10: #{tpu_custom_call.1} parent=1 // pred_check
      %p30 = pneg %p29
    $region11: #{tpu_custom_call.1} parent=1 // pred_check_branch
      %32 = sbr.rel (%p30) target = $region13
    $region12: #{tpu_custom_call.1} parent=1 // pred_region
      %33 = vst [vmem:[#allocation6] sm:$0xff] 0.0
      %34 = vst [vmem:[#allocation8] sm:$0xff] 0.0
    $region13: #{tpu_custom_call.1} parent=1 // pred_fallthru
      _
    %v35 = vld [vmem:[#allocation6] sm:$0xff]
    %v36 = vld [vmem:[#allocation8] sm:$0xff]
    %v37 = vld [vmem:[#allocation2] sm:$0xff]
    %v38 = vmul.f32 %v35, 0.9
    %v39 = vmul.f32 %v36, 0.1
    %v40 = vadd.f32 %v38, %v39
    %v41 = vmul.f32 %v36, 0.8
    %vm42 = vcmp.gt.f32.partialorder %v40, 1.0
    %v43 = vsel %vm42, 1, 0
    %v44 = vcvt.s32.f32 %v43
    %45 = vst [vmem:[#allocation5] sm:$0xff] %v44
    %v46 = vsel %vm42, 0.0, %v40
    %v47 = vadd.f32 %v41, %v37
    %s48 = scalar_lea.vmem [#allocation2], 8
    %v49 = vld [vmem:[%s48] sm:$0xff]
    %v50 = vmul.f32 %v46, 0.9
    %v51 = vmul.f32 %v47, 0.1
    %v52 = vadd.f32 %v50, %v51
    %v53 = vmul.f32 %v47, 0.8
    %vm54 = vcmp.gt.f32.partialorder %v52, 1.0
    %v55 = vsel %vm54, 1, 0
    %v56 = vcvt.s32.f32 %v55
    %s57 = scalar_lea.vmem [#allocation5], 8
    %58 = vst [vmem:[%s57] sm:$0xff] %v56
    %v59 = vsel %vm54, 0.0, %v52
    %v60 = vadd.f32 %v53, %v49
    %s61 = scalar_lea.vmem [#allocation2], 16
    %v62 = vld [vmem:[%s61] sm:$0xff]
    %v63 = vmul.f32 %v59, 0.9
    %v64 = vmul.f32 %v60, 0.1
    %v65 = vadd.f32 %v63, %v64
    %v66 = vmul.f32 %v60, 0.8
    %vm67 = vcmp.gt.f32.partialorder %v65, 1.0
    %v68 = vsel %vm67, 1, 0
    %v69 = vcvt.s32.f32 %v68
    %s70 = scalar_lea.vmem [#allocation5], 16
    %71 = vst [vmem:[%s70] sm:$0xff] %v69
    %v72 = vsel %vm67, 0.0, %v65
    %v73 = vadd.f32 %v66, %v62
    %s74 = scalar_lea.vmem [#allocation2], 24
    %v75 = vld [vmem:[%s74] sm:$0xff]
    %v76 = vmul.f32 %v72, 0.9
    %v77 = vmul.f32 %v73, 0.1
    %v78 = vadd.f32 %v76, %v77
    %v79 = vmul.f32 %v73, 0.8
    %vm80 = vcmp.gt.f32.partialorder %v78, 1.0
    %v81 = vsel %vm80, 1, 0
    %v82 = vcvt.s32.f32 %v81
    %s83 = scalar_lea.vmem [#allocation5], 24
    %84 = vst [vmem:[%s83] sm:$0xff] %v82
    %v85 = vsel %vm80, 0.0, %v78
    %v86 = vadd.f32 %v79, %v75
    %s87 = scalar_lea.vmem [#allocation2], 32
    %v88 = vld [vmem:[%s87] sm:$0xff]
    %v89 = vmul.f32 %v85, 0.9
    %v90 = vmul.f32 %v86, 0.1
    %v91 = vadd.f32 %v89, %v90
    %v92 = vmul.f32 %v86, 0.8
    %vm93 = vcmp.gt.f32.partialorder %v91, 1.0
    %v94 = vsel %vm93, 1, 0
    %v95 = vcvt.s32.f32 %v94
    %s96 = scalar_lea.vmem [#allocation5], 32
    %97 = vst [vmem:[%s96] sm:$0xff] %v95
    %v98 = vsel %vm93, 0.0, %v91
    %v99 = vadd.f32 %v92, %v88
    %s100 = scalar_lea.vmem [#allocation2], 40
    %v101 = vld [vmem:[%s100] sm:$0xff]
    %v102 = vmul.f32 %v98, 0.9
    %v103 = vmul.f32 %v99, 0.1
    %v104 = vadd.f32 %v102, %v103
    %v105 = vmul.f32 %v99, 0.8
    %vm106 = vcmp.gt.f32.partialorder %v104, 1.0
    %v107 = vsel %vm106, 1, 0
    %v108 = vcvt.s32.f32 %v107
    %s109 = scalar_lea.vmem [#allocation5], 40
    %110 = vst [vmem:[%s109] sm:$0xff] %v108
    %v111 = vsel %vm106, 0.0, %v104
    %v112 = vadd.f32 %v105, %v101
    %s113 = scalar_lea.vmem [#allocation2], 48
    %v114 = vld [vmem:[%s113] sm:$0xff]
    %v115 = vmul.f32 %v111, 0.9
    %v116 = vmul.f32 %v112, 0.1
    %v117 = vadd.f32 %v115, %v116
    %v118 = vmul.f32 %v112, 0.8
    %vm119 = vcmp.gt.f32.partialorder %v117, 1.0
    %v120 = vsel %vm119, 1, 0
    %v121 = vcvt.s32.f32 %v120
    %s122 = scalar_lea.vmem [#allocation5], 48
    %123 = vst [vmem:[%s122] sm:$0xff] %v121
    %v124 = vsel %vm119, 0.0, %v117
    %v125 = vadd.f32 %v118, %v114
    %s126 = scalar_lea.vmem [#allocation2], 56
    %v127 = vld [vmem:[%s126] sm:$0xff]
    %v128 = vmul.f32 %v124, 0.9
    %v129 = vmul.f32 %v125, 0.1
    %v130 = vadd.f32 %v128, %v129
    %v131 = vmul.f32 %v125, 0.8
    %vm132 = vcmp.gt.f32.partialorder %v130, 1.0
    %v133 = vsel %vm132, 1, 0
    %v134 = vcvt.s32.f32 %v133
    %s135 = scalar_lea.vmem [#allocation5], 56
    %136 = vst [vmem:[%s135] sm:$0xff] %v134
    %v137 = vsel %vm132, 0.0, %v130
    %v138 = vadd.f32 %v131, %v127
    %139 = vst [vmem:[#allocation6] sm:$0xff] %v137
    %140 = vst [vmem:[#allocation8] sm:$0xff] %v138
    // Predicated region
    $region14: #{tpu_custom_call.1} parent=1 // pred_check
      _
    $region15: #{tpu_custom_call.1} parent=1 // pred_check_branch
      %142 = sbr.rel (0) target = $region17
    $region16: #{tpu_custom_call.1} parent=1 // pred_region
      %144 = vsyncadd [#allocation4], 0
      %s145 = sshll.u32 [#allocation5], 4
      %s146 = int_to_ptr.vmem [resolvable:$true] %s145
      %s147 = sshll.u32 %s1, 4
      %s148 = int_to_ptr.hbm [resolvable:$true] %s147
      %153 = dma.vmem_to_hbm [thread:$0]  %s146, 1024, %s148, [#allocation4], 128, 128, 8
    $region17: #{tpu_custom_call.1} parent=1 // pred_fallthru
      _
    // Predicated region
    $region18: #{tpu_custom_call.1} parent=1 // pred_check
      _
    $region19: #{tpu_custom_call.1} parent=1 // pred_check_branch
      %155 = sbr.rel (0) target = $region21
    $region20: #{tpu_custom_call.1} parent=1 // pred_region
      %157 = vsyncadd [#allocation7], 0
      %s159 = sshll.u32 [#allocation6], 4
      %s160 = int_to_ptr.vmem [resolvable:$true] %s159
      %s161 = sshll.u32 %s2, 4
      %s162 = int_to_ptr.hbm [resolvable:$true] %s161
      %164 = dma.vmem_to_hbm [thread:$0]  %s160, 128, %s162, [#allocation7]
    $region21: #{tpu_custom_call.1} parent=1 // pred_fallthru
      _
    // Predicated region
    $region22: #{tpu_custom_call.1} parent=1 // pred_check
      _
    $region23: #{tpu_custom_call.1} parent=1 // pred_check_branch
      %166 = sbr.rel (0) target = $region25
    $region24: #{tpu_custom_call.1} parent=1 // pred_region
      %168 = vsyncadd [#allocation7], 0
      %s170 = sshll.u32 [#allocation8], 4
      %s171 = int_to_ptr.vmem [resolvable:$true] %s170
      %s172 = sshll.u32 %s3, 4
      %s173 = int_to_ptr.hbm [resolvable:$true] %s172
      %175 = dma.vmem_to_hbm [thread:$0]  %s171, 128, %s173, [#allocation7]
    $region25: #{tpu_custom_call.1} parent=1 // pred_fallthru
      _
    // Predicated region
    $region26: #{tpu_custom_call.1} parent=1 // pred_check
      _
    $region27: #{tpu_custom_call.1} parent=1 // pred_check_branch
      %177 = sbr.rel (0) target = $region29
    $region28: #{tpu_custom_call.1} parent=1 // pred_region
      %179 = dma.done [#allocation4], 1024
    $region29: #{tpu_custom_call.1} parent=1 // pred_fallthru
      _
    // Predicated region
    $region30: #{tpu_custom_call.1} parent=1 // pred_check
      _
    $region31: #{tpu_custom_call.1} parent=1 // pred_check_branch
      %181 = sbr.rel (0) target = $region33
    $region32: #{tpu_custom_call.1} parent=1 // pred_region
      %183 = dma.done [#allocation7], 128
    $region33: #{tpu_custom_call.1} parent=1 // pred_fallthru
      _
    // Predicated region
    $region34: #{tpu_custom_call.1} parent=1 // pred_check
      _
    $region35: #{tpu_custom_call.1} parent=1 // pred_check_branch
      %185 = sbr.rel (0) target = $region37
    $region36: #{tpu_custom_call.1} parent=1 // pred_region
      %187 = dma.done [#allocation7], 128
    $region37: #{tpu_custom_call.1} parent=1 // pred_fallthru
      _
    %188 = vsyncpa [#allocation3], 1
    %189 = vsyncpa [#allocation4], 1
    %190 = vsyncpa [#allocation7], 1

</llo_original>
